<compile_context>
chip_gen: v5e
topology: v5e:2x2
jax: 0.10.0
libtpu: 0.0.40
codegen_flags: <defaults>
</compile_context>

<pallas_src>
import jax
import jax.numpy as jnp
from jax import lax
from jax.experimental import pallas as pl
from jax.experimental.pallas import tpu as pltpu


def _round_up(x, m):
    return (x + m - 1) // m * m


def _linear_kernel(c_ref, w_ref, b_ref, o_ref):
    # c_ref: (TILE_M, d_in)    compute dtype (bf16 by default)
    # w_ref: (d_p_pad, d_in)   compute dtype (nn.Linear layout, contract dim 1)
    # b_ref: (1, d_p_pad)      f32
    # o_ref: (TILE_M, d_p_pad) output dtype (lane-dense, unmasked stores)
    acc = lax.dot_general(
        c_ref[...], w_ref[...],
        dimension_numbers=(((1,), (1,)), ((), ())),   # C @ W^T on the MXU
        preferred_element_type=jnp.float32)
    o_ref[...] = (acc + b_ref[...]).astype(o_ref.dtype)


def object_model_forward(C, weight, bias, *,
                         compute_dtype=jnp.bfloat16,
                         tile_m=2048):
    """Pallas implementation of nn.Linear(D_in, D_P) applied to C.

    C:      (..., D_in)  float32
    weight: (D_P, D_in)  float32   (PyTorch nn.Linear convention)
    bias:   (D_P,)       float32
    returns (..., D_P)   float32 (same dtype as C)
    """
    *lead, d_in = C.shape
    d_p = weight.shape[0]
    out_dtype = C.dtype

    M = 1
    for s in lead:
        M *= s
    M = max(M, 1)

    # Sublane multiple: bf16 packs 16 rows per vreg sublane group.
    sub = 16 if jnp.dtype(compute_dtype) == jnp.dtype(jnp.bfloat16) else 8
    tile_m = _round_up(min(tile_m, _round_up(M, sub)), sub)
    m_pad = _round_up(M, tile_m)

    # Lane-dense output: pad D_P up to a multiple of 128.
    d_p_pad = _round_up(d_p, 128)

    # Inputs: flatten leading dims, cast to compute dtype, pad rows.
    c2d = C.reshape(M, d_in).astype(compute_dtype)
    if m_pad != M:
        c2d = jnp.pad(c2d, ((0, m_pad - M), (0, 0)))

    w = weight.astype(compute_dtype)
    b = bias.astype(jnp.float32)
    if d_p_pad != d_p:
        w = jnp.pad(w, ((0, d_p_pad - d_p), (0, 0)))
        b = jnp.pad(b, ((0, d_p_pad - d_p),))
    b2d = b.reshape(1, d_p_pad)

    grid = (m_pad // tile_m,)
    out_isz = jnp.dtype(out_dtype).itemsize
    cmp_isz = jnp.dtype(compute_dtype).itemsize
    cost = pl.CostEstimate(
        flops=2 * m_pad * d_in * d_p_pad,
        transcendentals=0,
        bytes_accessed=(m_pad * d_in * cmp_isz          # C tiles
                        + d_p_pad * d_in * cmp_isz      # weight (resident)
                        + d_p_pad * 4                   # bias
                        + m_pad * d_p_pad * out_isz))   # output tiles

    out2d = pl.pallas_call(
        _linear_kernel,
        out_shape=jax.ShapeDtypeStruct((m_pad, d_p_pad), out_dtype),
        grid_spec=pltpu.PrefetchScalarGridSpec(
            num_scalar_prefetch=0,
            grid=grid,
            in_specs=[
                pl.BlockSpec((tile_m, d_in), lambda i: (i, 0)),     # C tile
                pl.BlockSpec((d_p_pad, d_in), lambda i: (0, 0)),    # weight (VMEM-resident)
                pl.BlockSpec((1, d_p_pad), lambda i: (0, 0)),       # bias (VMEM-resident)
            ],
            out_specs=pl.BlockSpec((tile_m, d_p_pad), lambda i: (i, 0)),
        ),
        compiler_params=pltpu.CompilerParams(
            dimension_semantics=("parallel",),          # megacore sharding on v7x
            vmem_limit_bytes=32 * 1024 * 1024,          # safe on v5e/v6e/v7x
        ),
        cost_estimate=cost,
    )(c2d, w, b2d)

    return out2d[:M, :d_p].reshape(*lead, d_p)


if __name__ == "__main__":
    # Small interaction-network-style shapes.
    D_S, D_X, D_E, D_P = 6, 2, 8, 32
    D_in = D_S + D_X + D_E            # 16
    batch, n_objects = 2, 8

    key = jax.random.PRNGKey(0)
    k_c, k_w, k_b, k_c2 = jax.random.split(key, 4)

    # Deterministic parameter init (PyTorch nn.Linear style: U(-1/sqrt(fan_in), 1/sqrt(fan_in))).
    bound = 1.0 / (D_in ** 0.5)
    weight = jax.random.uniform(k_w, (D_P, D_in), jnp.float32, -bound, bound)
    bias = jax.random.uniform(k_b, (D_P,), jnp.float32, -bound, bound)

    # --- Test 1: module-sized input, single tile ---
    C = jax.random.normal(k_c, (batch, n_objects, D_in), jnp.float32)
    out = jax.block_until_ready(object_model_forward(C, weight, bias))
    assert out.shape == (batch, n_objects, D_P)

    # Reference mirroring the kernel's bf16-operand / f32-accumulate matmul.
    c_bf = C.astype(jnp.bfloat16).astype(jnp.float32)
    w_bf = weight.astype(jnp.bfloat16).astype(jnp.float32)
    ref_bf = c_bf @ w_bf.T + bias
    assert jnp.allclose(out, ref_bf, atol=1e-4, rtol=1e-4)
    # Loose check against the pure-f32 PyTorch Linear semantics.
    ref_f32 = C @ weight.T + bias
    assert jnp.allclose(out, ref_f32, atol=5e-2, rtol=5e-2)

    # --- Test 2: M not divisible by TILE_M, multi-step grid (padding + tiling path) ---
    n_objects2 = 100                                   # M = 200, tile_m = 64 -> grid (4,)
    C2 = jax.random.normal(k_c2, (batch, n_objects2, D_in), jnp.float32)
    out2 = jax.block_until_ready(
        object_model_forward(C2, weight, bias, tile_m=64))
    assert out2.shape == (batch, n_objects2, D_P)
    c2_bf = C2.astype(jnp.bfloat16).astype(jnp.float32)
    ref2 = c2_bf @ w_bf.T + bias
    assert jnp.allclose(out2, ref2, atol=1e-4, rtol=1e-4)

    print("KERNEL_OK")
</pallas_src>

<mosaic_0001>
module attributes {stable_mosaic.version = 11 : i64} {
  func.func @_linear_kernel(%arg0: i32, %arg1: memref<16x16xbf16, #tpu.memory_space<vmem>>, %arg2: memref<128x16xbf16, #tpu.memory_space<vmem>>, %arg3: memref<1x128xf32, #tpu.memory_space<vmem>>, %arg4: memref<16x128xf32, #tpu.memory_space<vmem>>) attributes {dimension_semantics = [#tpu.dimension_semantics<parallel>], iteration_bounds = array<i64: 1>, scalar_prefetch = 0 : i64, scratch_operands = 0 : i64, tpu.core_type = #tpu.core_type<tc>, window_params = [{transform_indices = @transform_0, window_bounds = array<i64: 16, 16>}, {pipeline_mode = #tpu.pipeline_mode<synchronous>, transform_indices = @transform_1, window_bounds = array<i64: 128, 16>}, {pipeline_mode = #tpu.pipeline_mode<synchronous>, transform_indices = @transform_2, window_bounds = array<i64: 1, 128>}, {transform_indices = @transform_3, window_bounds = array<i64: 16, 128>}]} {
    %c0 = arith.constant 0 : index
    %c0_0 = arith.constant 0 : index
    %0 = vector.load %arg1[%c0, %c0_0] : memref<16x16xbf16, #tpu.memory_space<vmem>>, vector<16x16xbf16>
    %c0_1 = arith.constant 0 : index
    %c0_2 = arith.constant 0 : index
    %1 = vector.load %arg2[%c0_1, %c0_2] : memref<128x16xbf16, #tpu.memory_space<vmem>>, vector<128x16xbf16>
    %cst = arith.constant dense<0.000000e+00> : vector<16x128xf32>
    %2 = tpu.matmul %0, %1, %cst {dimension_numbers = #tpu.dot_dimension_numbers<[1], [1], [0], [0], [0, 0, 1, 0], [], []>} : vector<16x16xbf16>, vector<128x16xbf16>, vector<16x128xf32> -> vector<16x128xf32>
    %c0_3 = arith.constant 0 : index
    %c0_4 = arith.constant 0 : index
    %3 = vector.load %arg3[%c0_3, %c0_4] : memref<1x128xf32, #tpu.memory_space<vmem>>, vector<1x128xf32>
    %4 = vector.broadcast %3 : vector<1x128xf32> to vector<16x128xf32>
    %5 = arith.addf %2, %4 : vector<16x128xf32>
    %c0_5 = arith.constant 0 : index
    %c0_6 = arith.constant 0 : index
    %6 = vector.load %arg4[%c0_5, %c0_6] : memref<16x128xf32, #tpu.memory_space<vmem>>, vector<16x128xf32>
    tpu.vector_store %arg4[%c0_5, %c0_6], %5 {strides = array<i32>} : memref<16x128xf32, #tpu.memory_space<vmem>>, vector<16x128xf32>,
    return
  }
  func.func @transform_0(%arg0: i32) -> (i32, i32) {
    %c0_i32 = arith.constant 0 : i32
    %c0_i32_0 = arith.constant 0 : i32
    return %arg0, %c0_i32 : i32, i32
  }
  func.func @transform_1(%arg0: i32) -> (i32, i32) {
    %c0_i32 = arith.constant 0 : i32
    %c0_i32_0 = arith.constant 0 : i32
    %c0_i32_1 = arith.constant 0 : i32
    return %c0_i32, %c0_i32_0 : i32, i32
  }
  func.func @transform_2(%arg0: i32) -> (i32, i32) {
    %c0_i32 = arith.constant 0 : i32
    %c0_i32_0 = arith.constant 0 : i32
    %c0_i32_1 = arith.constant 0 : i32
    return %c0_i32, %c0_i32_0 : i32, i32
  }
  func.func @transform_3(%arg0: i32) -> (i32, i32) {
    %c0_i32 = arith.constant 0 : i32
    %c0_i32_0 = arith.constant 0 : i32
    return %arg0, %c0_i32 : i32, i32
  }
}

</mosaic_0001>

<llo_original>
// kernel: tpu_custom_call.1
$region0: #{tpu_custom_call.1}
  #allocation0 [shape = 'u32[]', space=smem, size = 0x4, offset = 0x4, fixed_abs, tag = 'smem constant byte address 0x4 - core index']
  #allocation1 [shape = 'u32[72,128]{1,0:T(1,128)}', space=vmem, size = 0x9000, scoped, tag = 'internal scratch']
  %s0 = inlined_call_operand.vmem [shape: bf16[16,16], index: 0, kind: input, shape index: {}]
  %s1 = inlined_call_operand.vmem [shape: bf16[128,16], index: 1, kind: input, shape index: {}]
  %s2 = inlined_call_operand.vmem [shape: f32[1,128], index: 2, kind: input, shape index: {}]
  %s3 = inlined_call_operand.hbm [shape: f32[16,128], index: 3, kind: output, shape index: {}]
  %s4 = sld [smem:[#allocation0]]
  $region22: #{tpu_custom_call.1} parent=0
    _
  %s6 = ssub.s32 1, %s4
  %s7 = scalar_select 0, %s6, %s4
  $region1: #{tpu_custom_call.1} parent=0
    #allocation2 [shape = 'u8[8192]{0}', space=vmem, size = 0x2000, scoped, tag = 'output window, operand 0, single buffered']
    #allocation3 [shape = 's32[1]{0}', space=sflag, size = 0x4, scoped, tag = 'scoped memory for tpu_custom_call.1']
    %8 = vsyncpa [#allocation3], 0
    // Predicated region
    $region2: #{tpu_custom_call.1} parent=1 // pred_check
      _
    $region3: #{tpu_custom_call.1} parent=1 // pred_check_branch
      %10 = sbr.rel (0) target = $region5
    $region4: #{tpu_custom_call.1} parent=1 // pred_region
      _
    $region5: #{tpu_custom_call.1} parent=1 // pred_fallthru
      _
    // Predicated region
    $region6: #{tpu_custom_call.1} parent=1 // pred_check
      _
    $region7: #{tpu_custom_call.1} parent=1 // pred_check_branch
      %12 = sbr.rel (0) target = $region9
    $region8: #{tpu_custom_call.1} parent=1 // pred_region
      _
    $region9: #{tpu_custom_call.1} parent=1 // pred_fallthru
      _
    // Predicated region
    $region10: #{tpu_custom_call.1} parent=1 // pred_check
      _
    $region11: #{tpu_custom_call.1} parent=1 // pred_check_branch
      %14 = sbr.rel (0) target = $region13
    $region12: #{tpu_custom_call.1} parent=1 // pred_region
      _
    $region13: #{tpu_custom_call.1} parent=1 // pred_fallthru
      _
    %v15 = vld [vmem:[%s0] sm:$0xf]
    %v16 = vld [vmem:[%s0 + $0x4] sm:$0xf]
    %v17 = vld [vmem:[%s1] sm:$0xf]
    %v18 = vld [vmem:[%s1 + $0x4] sm:$0xf]
    %v19 = vld [vmem:[%s1 + $0x8] sm:$0xf]
    %v20 = vld [vmem:[%s1 + $0xc] sm:$0xf]
    %v21 = vld [vmem:[%s1 + $0x10] sm:$0xf]
    %v22 = vld [vmem:[%s1 + $0x14] sm:$0xf]
    %v23 = vld [vmem:[%s1 + $0x18] sm:$0xf]
    %v24 = vld [vmem:[%s1 + $0x1c] sm:$0xf]
    %v25 = vld [vmem:[%s1 + $0x20] sm:$0xf]
    %v26 = vld [vmem:[%s1 + $0x24] sm:$0xf]
    %v27 = vld [vmem:[%s1 + $0x28] sm:$0xf]
    %v28 = vld [vmem:[%s1 + $0x2c] sm:$0xf]
    %v29 = vld [vmem:[%s1 + $0x30] sm:$0xf]
    %v30 = vld [vmem:[%s1 + $0x34] sm:$0xf]
    %v31 = vld [vmem:[%s1 + $0x38] sm:$0xf]
    %v32 = vld [vmem:[%s1 + $0x3c] sm:$0xf]
    %v33 = vld [vmem:[%s2] sm:$0x1]
    %v35 = vperm.slane %v33, 0
    %v39 = vunpack.c.l.b16 %v15
    %v40 = vunpack.c.l.b16 %v16
    %v41 = vpack.c.b16 %v40, %v39
    %v58 = vunpack.c.l.b16 %v17
    %v59 = vunpack.c.l.b16 %v18
    %v60 = vunpack.c.l.b16 %v19
    %v61 = vunpack.c.l.b16 %v20
    %v62 = vunpack.c.l.b16 %v21
    %v63 = vunpack.c.l.b16 %v22
    %v64 = vunpack.c.l.b16 %v23
    %v65 = vunpack.c.l.b16 %v24
    %v66 = vunpack.c.l.b16 %v25
    %v67 = vunpack.c.l.b16 %v26
    %v68 = vunpack.c.l.b16 %v27
    %v69 = vunpack.c.l.b16 %v28
    %v70 = vunpack.c.l.b16 %v29
    %v71 = vunpack.c.l.b16 %v30
    %v72 = vunpack.c.l.b16 %v31
    %v73 = vunpack.c.l.b16 %v32
    %v74 = vpack.c.b16 %v59, %v58
    %v75 = vpack.c.b16 %v61, %v60
    %v76 = vpack.c.b16 %v63, %v62
    %v77 = vpack.c.b16 %v65, %v64
    %v78 = vpack.c.b16 %v67, %v66
    %v79 = vpack.c.b16 %v69, %v68
    %v80 = vpack.c.b16 %v71, %v70
    %v81 = vpack.c.b16 %v73, %v72
    %vm82 = vcmask 130048
    %v84 = vsel %vm82, %v41, 0
    %v87 = vsel %vm82, %v74, 0
    %v90 = vsel %vm82, %v75, 0
    %v93 = vsel %vm82, %v76, 0
    %v96 = vsel %vm82, %v77, 0
    %v99 = vsel %vm82, %v78, 0
    %v102 = vsel %vm82, %v79, 0
    %v105 = vsel %vm82, %v80, 0
    %v108 = vsel %vm82, %v81, 0
    %110 = vmatpush.bf16.xpose.msra.mxu0 %v108
    %111 = vmatpush.bf16.xpose.msra.mxu0 %v105
    %112 = vmatpush.bf16.xpose.msra.mxu0 %v102
    %113 = vmatpush.bf16.xpose.msra.mxu0 %v99
    %114 = vmatpush.bf16.xpose.msra.mxu0 %v96
    %115 = vmatpush.bf16.xpose.msra.mxu0 %v93
    %116 = vmatpush.bf16.xpose.msra.mxu0 %v90
    %117 = vmatpush.bf16.xpose.msra.mxu0 %v87
    %118 = vmatmul.bf16.gmra.mxu0 %v84
    %v119 = vpop.f32.mrf.mxu0
    %v120 = vadd.f32 %v35, %v119
    %v121 = vpop.f32.mrf.mxu0
    %v122 = vadd.f32 %v35, %v121
    %123 = vdwg.mxu0
    %124 = vst [vmem:[#allocation2] sm:$0xff] %v120
    %125 = vst [vmem:[#allocation2 + $0x8] sm:$0xff] %v122
    // Predicated region
    $region14: #{tpu_custom_call.1} parent=1 // pred_check
      _
    $region15: #{tpu_custom_call.1} parent=1 // pred_check_branch
      %127 = sbr.rel (0) target = $region17
    $region16: #{tpu_custom_call.1} parent=1 // pred_region
      %129 = vsyncadd [#allocation3], 0
      %s130 = sshll.u32 [#allocation2], 4
      %s131 = int_to_ptr.vmem [resolvable:$true] %s130
      %s132 = sshll.u32 %s3, 4
      %s133 = int_to_ptr.hbm [resolvable:$true] %s132
      %138 = dma.vmem_to_hbm [thread:$0]  %s131, 256, %s133, [#allocation3], 128, 128, 8
    $region17: #{tpu_custom_call.1} parent=1 // pred_fallthru
      _
    // Predicated region
    $region18: #{tpu_custom_call.1} parent=1 // pred_check
      _
    $region19: #{tpu_custom_call.1} parent=1 // pred_check_branch
      %140 = sbr.rel (0) target = $region21
    $region20: #{tpu_custom_call.1} parent=1 // pred_region
      %142 = dma.done [#allocation3], 256
    $region21: #{tpu_custom_call.1} parent=1 // pred_fallthru
      _
    %143 = vsyncpa [#allocation3], 1

</llo_original>
